<compile_context>
chip_gen: v7x
topology: tpu7x:2x2x1
jax: 0.10.0
libtpu: 0.0.40
codegen_flags: <defaults>
</compile_context>

<pallas_src>
import functools

import jax
import jax.numpy as jnp
from jax import lax
from jax.experimental import pallas as pl
from jax.experimental.pallas import tpu as pltpu


def _resblock_kernel(x_ref, w_ref, o_ref, xflat_ref, slab_ref,
                     *, H, W, C, KH, KW, PAD):
    # x_ref    : (1, C, H*W)          channels-first input, pixels on lanes
    # w_ref    : (C, KH*KW*C + 1)     fused weights: conv taps + residual id + bias col
    # o_ref    : (1, C, H*W)          lane-dense output
    # xflat_ref: (C, 2*PAD + H*W)     VMEM scratch, zero pads absorb h-boundary taps
    # slab_ref : (KH*KW*C + 1, H*W)   transposed im2col slab (K on sublanes, pixels on lanes)
    HW = H * W
    K0 = KH * KW * C

    x = x_ref[0]                                             # (C, HW)

    # Flat zero-padded copy of the image; PAD is 128-aligned so the bulk store
    # below is an unmasked, lane-aligned write.
    xflat_ref[:, 0:PAD] = jnp.zeros((C, PAD), x.dtype)
    xflat_ref[:, PAD + HW:PAD + HW + PAD] = jnp.zeros((C, PAD), x.dtype)
    xflat_ref[:, PAD:PAD + HW] = x

    # Column (w) index of every output pixel, used to mask w-boundary wrap.
    w_col = lax.broadcasted_iota(jnp.int32, (C, HW), 1) % W

    # Transposed im2col: each tap is a lane-shifted view of the flat image
    # written into C consecutive sublane rows of the slab.
    for kh in range(KH):
        for kw in range(KW):
            dh = kh - KH // 2
            dw = kw - KW // 2
            d = dh * W + dw
            patch = xflat_ref[:, PAD + d:PAD + d + HW]       # (C, HW)
            if dw > 0:
                patch = jnp.where(w_col >= W - dw, 0.0, patch)
            elif dw < 0:
                patch = jnp.where(w_col < -dw, 0.0, patch)
            t = kh * KW + kw
            slab_ref[t * C:(t + 1) * C, :] = patch
    slab_ref[K0:K0 + 1, :] = jnp.ones((1, HW), x.dtype)      # bias (ones) row

    # Single fused MXU matmul: conv (K = KH*KW*C) + bias + residual in one
    # contraction (residual identity and bias were folded into w_ref by the
    # wrapper), accumulated in f32.
    out = jnp.dot(w_ref[...], slab_ref[...],
                  preferred_element_type=jnp.float32)        # (C, HW)

    o_ref[0] = out.astype(o_ref.dtype)                       # lane-dense store


def _fuse_weights(weight_hwio, bias):
    """(KH,KW,Cin,Cout) HWIO + bias -> (Cout, KH*KW*Cin + 1) fused matmul weights.

    Folds the residual add (identity on the centre tap) and the bias (extra
    contraction row matched with a ones row in the im2col slab) into the
    single in-kernel matmul.
    """
    KH, KW, C_in, C_out = weight_hwio.shape
    w_mat = weight_hwio.reshape(KH * KW * C_in, C_out)       # row = (kh*KW+kw)*Cin + ci
    centre = (KH // 2) * KW + (KW // 2)
    eye = jnp.eye(C_in, C_out, dtype=w_mat.dtype)
    w_mat = w_mat.at[centre * C_in:(centre + 1) * C_in, :].add(eye)
    w_mat = jnp.concatenate(
        [w_mat, bias.reshape(1, C_out).astype(w_mat.dtype)], axis=0)
    return jnp.transpose(w_mat)                              # (C_out, K)


def residual_conv_block(x_nchw, weight_hwio, bias):
    """y = conv3x3_same(x) + bias + x   (ResidualAddBlock), NCHW in / NCHW out."""
    N, C, H, W = x_nchw.shape
    KH, KW, C_in, C_out = weight_hwio.shape
    assert C == C_in == C_out, "residual add requires C_in == C_out"

    HW = H * W
    K = KH * KW * C_in + 1
    pad_req = (KH // 2) * W + (KW // 2)                      # max |tap offset| in flat pixels
    PAD = ((pad_req + 127) // 128) * 128                     # 128-align the interior store

    # NCHW is already channels-first: flattening H,W is a free reshape (no
    # transpose, no extra HBM round trip).
    x_flat = x_nchw.reshape(N, C, HW)
    w_fused = _fuse_weights(weight_hwio, bias)               # (C_out, K), tiny

    kernel = functools.partial(
        _resblock_kernel, H=H, W=W, C=C, KH=KH, KW=KW, PAD=PAD)

    out_flat = pl.pallas_call(
        kernel,
        out_shape=jax.ShapeDtypeStruct((N, C_out, HW), x_nchw.dtype),
        grid_spec=pltpu.PrefetchScalarGridSpec(
            num_scalar_prefetch=0,
            grid=(N,),
            in_specs=[
                pl.BlockSpec((1, C, HW), lambda n: (n, 0, 0)),
                pl.BlockSpec((C_out, K), lambda n: (0, 0)),
            ],
            out_specs=pl.BlockSpec((1, C_out, HW), lambda n: (n, 0, 0)),
            scratch_shapes=[
                pltpu.VMEM((C, HW + 2 * PAD), x_nchw.dtype),   # flat-padded image
                pltpu.VMEM((K, HW), x_nchw.dtype),             # transposed im2col slab
            ],
        ),
        compiler_params=pltpu.CompilerParams(
            dimension_semantics=("parallel",),
        ),
    )(x_flat, w_fused)

    return out_flat.reshape(N, C_out, H, W)


def _reference(x_nchw, weight_hwio, bias):
    # Pure-JAX reference: conv3x3 'same' + bias + residual.
    w_oihw = jnp.transpose(weight_hwio, (3, 2, 0, 1))        # HWIO -> OIHW
    y = lax.conv_general_dilated(
        x_nchw, w_oihw, window_strides=(1, 1), padding="SAME",
        dimension_numbers=("NCHW", "OIHW", "NCHW"),
    )
    y = y + bias.reshape(1, -1, 1, 1)
    return y + x_nchw


if __name__ == "__main__":
    key = jax.random.PRNGKey(0)
    kx, kw, kb = jax.random.split(key, 3)

    N, C, H, W = 2, 4, 16, 16
    KH = KW = 3

    x = jax.random.normal(kx, (N, C, H, W), dtype=jnp.float32)
    weight = jax.random.normal(kw, (KH, KW, C, C), dtype=jnp.float32) * 0.1
    bias = jax.random.normal(kb, (C,), dtype=jnp.float32) * 0.1

    out = jax.block_until_ready(residual_conv_block(x, weight, bias))
    ref = jax.block_until_ready(_reference(x, weight, bias))

    assert out.shape == (N, C, H, W)
    assert jnp.allclose(out, ref, atol=1e-4, rtol=1e-4), "mismatch vs reference"

    print("KERNEL_OK")
</pallas_src>

<mosaic_0001>
module attributes {stable_mosaic.version = 11 : i64} {
  func.func @_resblock_kernel(%arg0: i32, %arg1: memref<1x4x256xf32, #tpu.memory_space<vmem>>, %arg2: memref<4x37xf32, #tpu.memory_space<vmem>>, %arg3: memref<1x4x256xf32, #tpu.memory_space<vmem>>, %arg4: memref<4x512xf32, #tpu.memory_space<vmem>>, %arg5: memref<37x256xf32, #tpu.memory_space<vmem>>) attributes {dimension_semantics = [#tpu.dimension_semantics<parallel>], iteration_bounds = array<i64: 2>, scalar_prefetch = 0 : i64, scratch_operands = 2 : i64, tpu.core_type = #tpu.core_type<tc>, window_params = [{transform_indices = @transform_0, window_bounds = array<i64: 1, 4, 256>}, {pipeline_mode = #tpu.pipeline_mode<synchronous>, transform_indices = @transform_1, window_bounds = array<i64: 4, 37>}, {transform_indices = @transform_2, window_bounds = array<i64: 1, 4, 256>}]} {
    %c0 = arith.constant 0 : index
    %c0_0 = arith.constant 0 : index
    %c0_1 = arith.constant 0 : index
    %0 = vector.load %arg1[%c0, %c0_0, %c0_1] : memref<1x4x256xf32, #tpu.memory_space<vmem>>, vector<1x4x256xf32>
    %1 = vector.shape_cast %0 : vector<1x4x256xf32> to vector<4x256xf32>
    %cst = arith.constant 0.000000e+00 : f32
    %2 = vector.broadcast %cst : f32 to vector<4x128xf32>
    %c0_2 = arith.constant 0 : index
    %c0_3 = arith.constant 0 : index
    %3 = vector.load %arg4[%c0_2, %c0_3] : memref<4x512xf32, #tpu.memory_space<vmem>>, vector<4x128xf32>
    tpu.vector_store %arg4[%c0_2, %c0_3], %2 {strides = array<i32>} : memref<4x512xf32, #tpu.memory_space<vmem>>, vector<4x128xf32>,
    %cst_4 = arith.constant 0.000000e+00 : f32
    %4 = vector.broadcast %cst_4 : f32 to vector<4x128xf32>
    %c0_5 = arith.constant 0 : index
    %c384 = arith.constant 384 : index
    %5 = vector.load %arg4[%c0_5, %c384] : memref<4x512xf32, #tpu.memory_space<vmem>>, vector<4x128xf32>
    tpu.vector_store %arg4[%c0_5, %c384], %4 {strides = array<i32>} : memref<4x512xf32, #tpu.memory_space<vmem>>, vector<4x128xf32>,
    %c0_6 = arith.constant 0 : index
    %c128 = arith.constant 128 : index
    %6 = vector.load %arg4[%c0_6, %c128] : memref<4x512xf32, #tpu.memory_space<vmem>>, vector<4x256xf32>
    tpu.vector_store %arg4[%c0_6, %c128], %1 {strides = array<i32>} : memref<4x512xf32, #tpu.memory_space<vmem>>, vector<4x256xf32>,
    %7 = tpu.iota {dimensions = array<i32: 1>} : vector<4x256xi32>
    %c16_i32 = arith.constant 16 : i32
    %c0_i32 = arith.constant 0 : i32
    %8 = arith.cmpi eq, %c16_i32, %c0_i32 : i32
    %c1_i32 = arith.constant 1 : i32
    %9 = arith.select %8, %c1_i32, %c16_i32 : i32
    %10 = vector.broadcast %9 : i32 to vector<4x256xi32>
    %11 = arith.remsi %7, %10 : vector<4x256xi32>
    %c0_i32_7 = arith.constant 0 : i32
    %12 = vector.broadcast %c0_i32_7 : i32 to vector<4x256xi32>
    %13 = arith.cmpi ne, %11, %12 : vector<4x256xi32>
    %c0_i32_8 = arith.constant 0 : i32
    %14 = vector.broadcast %c0_i32_8 : i32 to vector<4x256xi32>
    %15 = arith.cmpi slt, %11, %14 : vector<4x256xi32>
    %c0_i32_9 = arith.constant 0 : i32
    %16 = arith.cmpi slt, %9, %c0_i32_9 : i32
    %17 = vector.broadcast %16 : i1 to vector<4x256xi1>
    %18 = vector.broadcast %17 : vector<4x256xi1> to vector<4x256xi1>
    %19 = arith.xori %15, %18 : vector<4x256xi1>
    %20 = arith.andi %19, %13 : vector<4x256xi1>
    %21 = vector.broadcast %9 : i32 to vector<4x256xi32>
    %22 = arith.addi %11, %21 : vector<4x256xi32>
    %23 = arith.select %20, %22, %11 : vector<4x256xi1>, vector<4x256xi32>
    %c0_10 = arith.constant 0 : index
    %c111 = arith.constant 111 : index
    %24 = vector.load %arg4[%c0_10, %c111] : memref<4x512xf32, #tpu.memory_space<vmem>>, vector<4x256xf32>
    %c1_i32_11 = arith.constant 1 : i32
    %25 = vector.broadcast %c1_i32_11 : i32 to vector<4x256xi32>
    %26 = arith.cmpi slt, %23, %25 : vector<4x256xi32>
    %cst_12 = arith.constant 0.000000e+00 : f32
    %27 = vector.broadcast %cst_12 : f32 to vector<4x256xf32>
    %28 = arith.select %26, %27, %24 : vector<4x256xi1>, vector<4x256xf32>
    %c0_13 = arith.constant 0 : index
    %c0_14 = arith.constant 0 : index
    %29 = vector.load %arg5[%c0_13, %c0_14] : memref<37x256xf32, #tpu.memory_space<vmem>>, vector<4x256xf32>
    tpu.vector_store %arg5[%c0_13, %c0_14], %28 {strides = array<i32>} : memref<37x256xf32, #tpu.memory_space<vmem>>, vector<4x256xf32>,
    %c0_15 = arith.constant 0 : index
    %c112 = arith.constant 112 : index
    %30 = vector.load %arg4[%c0_15, %c112] : memref<4x512xf32, #tpu.memory_space<vmem>>, vector<4x256xf32>
    %c4 = arith.constant 4 : index
    %c0_16 = arith.constant 0 : index
    %31 = vector.load %arg5[%c4, %c0_16] : memref<37x256xf32, #tpu.memory_space<vmem>>, vector<4x256xf32>
    tpu.vector_store %arg5[%c4, %c0_16], %30 {strides = array<i32>} : memref<37x256xf32, #tpu.memory_space<vmem>>, vector<4x256xf32>,
    %c0_17 = arith.constant 0 : index
    %c113 = arith.constant 113 : index
    %32 = vector.load %arg4[%c0_17, %c113] : memref<4x512xf32, #tpu.memory_space<vmem>>, vector<4x256xf32>
    %c15_i32 = arith.constant 15 : i32
    %33 = vector.broadcast %c15_i32 : i32 to vector<4x256xi32>
    %34 = arith.cmpi sge, %23, %33 : vector<4x256xi32>
    %cst_18 = arith.constant 0.000000e+00 : f32
    %35 = vector.broadcast %cst_18 : f32 to vector<4x256xf32>
    %36 = arith.select %34, %35, %32 : vector<4x256xi1>, vector<4x256xf32>
    %c8 = arith.constant 8 : index
    %c0_19 = arith.constant 0 : index
    %37 = vector.load %arg5[%c8, %c0_19] : memref<37x256xf32, #tpu.memory_space<vmem>>, vector<4x256xf32>
    tpu.vector_store %arg5[%c8, %c0_19], %36 {strides = array<i32>} : memref<37x256xf32, #tpu.memory_space<vmem>>, vector<4x256xf32>,
    %c0_20 = arith.constant 0 : index
    %c127 = arith.constant 127 : index
    %38 = vector.load %arg4[%c0_20, %c127] : memref<4x512xf32, #tpu.memory_space<vmem>>, vector<4x256xf32>
    %c1_i32_21 = arith.constant 1 : i32
    %39 = vector.broadcast %c1_i32_21 : i32 to vector<4x256xi32>
    %40 = arith.cmpi slt, %23, %39 : vector<4x256xi32>
    %cst_22 = arith.constant 0.000000e+00 : f32
    %41 = vector.broadcast %cst_22 : f32 to vector<4x256xf32>
    %42 = arith.select %40, %41, %38 : vector<4x256xi1>, vector<4x256xf32>
    %c12 = arith.constant 12 : index
    %c0_23 = arith.constant 0 : index
    %43 = vector.load %arg5[%c12, %c0_23] : memref<37x256xf32, #tpu.memory_space<vmem>>, vector<4x256xf32>
    tpu.vector_store %arg5[%c12, %c0_23], %42 {strides = array<i32>} : memref<37x256xf32, #tpu.memory_space<vmem>>, vector<4x256xf32>,
    %c0_24 = arith.constant 0 : index
    %c128_25 = arith.constant 128 : index
    %44 = vector.load %arg4[%c0_24, %c128_25] : memref<4x512xf32, #tpu.memory_space<vmem>>, vector<4x256xf32>
    %c16 = arith.constant 16 : index
    %c0_26 = arith.constant 0 : index
    %45 = vector.load %arg5[%c16, %c0_26] : memref<37x256xf32, #tpu.memory_space<vmem>>, vector<4x256xf32>
    tpu.vector_store %arg5[%c16, %c0_26], %44 {strides = array<i32>} : memref<37x256xf32, #tpu.memory_space<vmem>>, vector<4x256xf32>,
    %c0_27 = arith.constant 0 : index
    %c129 = arith.constant 129 : index
    %46 = vector.load %arg4[%c0_27, %c129] : memref<4x512xf32, #tpu.memory_space<vmem>>, vector<4x256xf32>
    %c15_i32_28 = arith.constant 15 : i32
    %47 = vector.broadcast %c15_i32_28 : i32 to vector<4x256xi32>
    %48 = arith.cmpi sge, %23, %47 : vector<4x256xi32>
    %cst_29 = arith.constant 0.000000e+00 : f32
    %49 = vector.broadcast %cst_29 : f32 to vector<4x256xf32>
    %50 = arith.select %48, %49, %46 : vector<4x256xi1>, vector<4x256xf32>
    %c20 = arith.constant 20 : index
    %c0_30 = arith.constant 0 : index
    %51 = vector.load %arg5[%c20, %c0_30] : memref<37x256xf32, #tpu.memory_space<vmem>>, vector<4x256xf32>
    tpu.vector_store %arg5[%c20, %c0_30], %50 {strides = array<i32>} : memref<37x256xf32, #tpu.memory_space<vmem>>, vector<4x256xf32>,
    %c0_31 = arith.constant 0 : index
    %c143 = arith.constant 143 : index
    %52 = vector.load %arg4[%c0_31, %c143] : memref<4x512xf32, #tpu.memory_space<vmem>>, vector<4x256xf32>
    %c1_i32_32 = arith.constant 1 : i32
    %53 = vector.broadcast %c1_i32_32 : i32 to vector<4x256xi32>
    %54 = arith.cmpi slt, %23, %53 : vector<4x256xi32>
    %cst_33 = arith.constant 0.000000e+00 : f32
    %55 = vector.broadcast %cst_33 : f32 to vector<4x256xf32>
    %56 = arith.select %54, %55, %52 : vector<4x256xi1>, vector<4x256xf32>
    %c24 = arith.constant 24 : index
    %c0_34 = arith.constant 0 : index
    %57 = vector.load %arg5[%c24, %c0_34] : memref<37x256xf32, #tpu.memory_space<vmem>>, vector<4x256xf32>
    tpu.vector_store %arg5[%c24, %c0_34], %56 {strides = array<i32>} : memref<37x256xf32, #tpu.memory_space<vmem>>, vector<4x256xf32>,
    %c0_35 = arith.constant 0 : index
    %c144 = arith.constant 144 : index
    %58 = vector.load %arg4[%c0_35, %c144] : memref<4x512xf32, #tpu.memory_space<vmem>>, vector<4x256xf32>
    %c28 = arith.constant 28 : index
    %c0_36 = arith.constant 0 : index
    %59 = vector.load %arg5[%c28, %c0_36] : memref<37x256xf32, #tpu.memory_space<vmem>>, vector<4x256xf32>
    tpu.vector_store %arg5[%c28, %c0_36], %58 {strides = array<i32>} : memref<37x256xf32, #tpu.memory_space<vmem>>, vector<4x256xf32>,
    %c0_37 = arith.constant 0 : index
    %c145 = arith.constant 145 : index
    %60 = vector.load %arg4[%c0_37, %c145] : memref<4x512xf32, #tpu.memory_space<vmem>>, vector<4x256xf32>
    %c15_i32_38 = arith.constant 15 : i32
    %61 = vector.broadcast %c15_i32_38 : i32 to vector<4x256xi32>
    %62 = arith.cmpi sge, %23, %61 : vector<4x256xi32>
    %cst_39 = arith.constant 0.000000e+00 : f32
    %63 = vector.broadcast %cst_39 : f32 to vector<4x256xf32>
    %64 = arith.select %62, %63, %60 : vector<4x256xi1>, vector<4x256xf32>
    %c32 = arith.constant 32 : index
    %c0_40 = arith.constant 0 : index
    %65 = vector.load %arg5[%c32, %c0_40] : memref<37x256xf32, #tpu.memory_space<vmem>>, vector<4x256xf32>
    tpu.vector_store %arg5[%c32, %c0_40], %64 {strides = array<i32>} : memref<37x256xf32, #tpu.memory_space<vmem>>, vector<4x256xf32>,
    %cst_41 = arith.constant 1.000000e+00 : f32
    %66 = vector.broadcast %cst_41 : f32 to vector<1x256xf32>
    %c36 = arith.constant 36 : index
    %c0_42 = arith.constant 0 : index
    %67 = vector.load %arg5[%c36, %c0_42] : memref<37x256xf32, #tpu.memory_space<vmem>>, vector<1x256xf32>
    tpu.vector_store %arg5[%c36, %c0_42], %66 {strides = array<i32>} : memref<37x256xf32, #tpu.memory_space<vmem>>, vector<1x256xf32>,
    %c0_43 = arith.constant 0 : index
    %c0_44 = arith.constant 0 : index
    %68 = vector.load %arg2[%c0_43, %c0_44] : memref<4x37xf32, #tpu.memory_space<vmem>>, vector<4x37xf32>
    %c0_45 = arith.constant 0 : index
    %c0_46 = arith.constant 0 : index
    %69 = vector.load %arg5[%c0_45, %c0_46] : memref<37x256xf32, #tpu.memory_space<vmem>>, vector<37x256xf32>
    %cst_47 = arith.constant dense<0.000000e+00> : vector<4x256xf32>
    %70 = tpu.matmul %68, %69, %cst_47 {dimension_numbers = #tpu.dot_dimension_numbers<[1], [0], [0], [1], [0, 0, 1, 1], [], []>} : vector<4x37xf32>, vector<37x256xf32>, vector<4x256xf32> -> vector<4x256xf32>
    %c0_48 = arith.constant 0 : index
    %c0_49 = arith.constant 0 : index
    %c0_50 = arith.constant 0 : index
    %71 = vector.load %arg3[%c0_48, %c0_49, %c0_50] : memref<1x4x256xf32, #tpu.memory_space<vmem>>, vector<1x4x256xf32>
    %72 = vector.shape_cast %71 : vector<1x4x256xf32> to vector<4x256xf32>
    %73 = vector.shape_cast %70 : vector<4x256xf32> to vector<1x4x256xf32>
    tpu.vector_store %arg3[%c0_48, %c0_49, %c0_50], %73 {strides = array<i32>} : memref<1x4x256xf32, #tpu.memory_space<vmem>>, vector<1x4x256xf32>,
    return
  }
  func.func @transform_0(%arg0: i32) -> (i32, i32, i32) {
    %c0_i32 = arith.constant 0 : i32
    %c0_i32_0 = arith.constant 0 : i32
    %c0_i32_1 = arith.constant 0 : i32
    return %arg0, %c0_i32, %c0_i32_0 : i32, i32, i32
  }
  func.func @transform_1(%arg0: i32) -> (i32, i32) {
    %c0_i32 = arith.constant 0 : i32
    %c0_i32_0 = arith.constant 0 : i32
    %c0_i32_1 = arith.constant 0 : i32
    return %c0_i32, %c0_i32_0 : i32, i32
  }
  func.func @transform_2(%arg0: i32) -> (i32, i32, i32) {
    %c0_i32 = arith.constant 0 : i32
    %c0_i32_0 = arith.constant 0 : i32
    %c0_i32_1 = arith.constant 0 : i32
    return %arg0, %c0_i32, %c0_i32_0 : i32, i32, i32
  }
}

</mosaic_0001>

<llo_original>
// kernel: tpu_custom_call.1
$region0: #{tpu_custom_call.1}
  #allocation0 [shape = 'u32[]', space=smem, size = 0x4, offset = 0x4, fixed_abs, tag = 'smem constant byte address 0x4 - core index']
  #allocation1 [shape = 'u32[144,128]{1,0:T(1,128)}', space=vmem, size = 0x12000, scoped, tag = 'internal scratch']
  #allocation2 [shape = 'f32[4,512]{1,0:T(4,128)}', space=vmem, size = 0x2000, scoped, tag = 'scratch operand']
  #allocation3 [shape = 'f32[37,256]{1,0:T(8,128)}', space=vmem, size = 0xa000, scoped, tag = 'scratch operand']
  %s0 = inlined_call_operand.hbm [shape: f32[2,4,256], index: 0, kind: input, shape index: {}]
  %s1 = inlined_call_operand.hbm [shape: f32[4,37], index: 1, kind: input, shape index: {}]
  %s2 = inlined_call_operand.hbm [shape: f32[2,4,256], index: 2, kind: output, shape index: {}]
  %s3 = sld [smem:[#allocation0]]
  $region49: #{tpu_custom_call.1} parent=0
    _
  %s5 = ssub.s32 1, %s3
  %s6 = scalar_select 0, %s5, %s3
  $region1: #{tpu_custom_call.1} parent=0
    #allocation4 [shape = 'u8[8192]{0}', space=vmem, size = 0x2000, scoped, tag = 'input window, operand 0']
    #allocation5 [shape = 's32[2]{0}', space=sflag, size = 0x8, scoped, tag = 'scoped memory for tpu_custom_call.1']
    #allocation6 [shape = 's32[2]{0}', space=sflag, size = 0x8, scoped, tag = 'scoped memory for tpu_custom_call.1']
    #allocation7 [shape = 'u8[2048]{0}', space=vmem, size = 0x800, scoped, tag = 'input window, operand 1, single buffered']
    #allocation8 [shape = 's32[1]{0}', space=sflag, size = 0x4, scoped, tag = 'scoped memory for tpu_custom_call.1']
    #allocation9 [shape = 'u8[8192]{0}', space=vmem, size = 0x2000, scoped, tag = 'output window, operand 0']
    %7 = vsyncpa [#allocation5], 0
    %s8 = scalar_lea.sflag [#allocation5], 1
    %9 = vsyncpa %s8, 0
    %10 = vsyncpa [#allocation8], 0
    %11 = vsyncpa [#allocation6], 0
    %s12 = scalar_lea.sflag [#allocation6], 1
    %13 = vsyncpa %s12, 0
    loop: start=0, step=1, limit=4
    $region2: #{tpu_custom_call.1} parent=1 // loop_pre_header
      _
    $region3: #{tpu_custom_call.1} parent=1 // loop_header
      %s15 = sphi 0, %s19
      %p16 = scmp.ge.s32.totalorder %s15, 4
      %s25 = sphi 0, %s27
      %s28 = sphi 0, %s25
      %s29 = sphi 0, %s28
      %s45 = sphi 0, %s29
      %s49 = sphi 0, %s49
      %s51 = sphi 0, %s49
      %s52 = sphi 0, %s51
      %s66 = sphi 0, %s52
      %s72 = sphi 0, %s74
      %s75 = sphi 0, %s72
      %s76 = sphi 0, %s75
      %s92 = sphi 0, %s76
    $region4: #{tpu_custom_call.1} parent=1 // loop_header_branch
      %18 = sbr.rel (%p16) target = $region8
    $region5: #{tpu_custom_call.1} parent=1 // loop_body
      %s20 = ssub.s32 %s15, 1
      %s21 = ssub.s32 %s15, 2
      %s22 = sadd.s32 %s15, 1
      %s23 = ssub.s32 %s15, %s22
      %p24 = scmp.eq.s32.totalorder %s23, 0
      %s26 = sadd.s32 %s25, 1
      %s27 = scalar_select %p24, %s25, %s26
      %p30 = pneg %p24
      %p31 = scmp.eq.s32.totalorder %s15, 1
      %p32 = por %p30, %p31
      %p33 = scmp.ne.s32.totalorder %s25, %s28
      %p34 = scmp.eq.s32.totalorder %s15, 0
      %p35 = por %p33, %p34
      %p36 = scmp.ne.s32.totalorder %s25, %s28
      %p37 = scmp.eq.s32.totalorder %s20, 1
      %p38 = por %p36, %p37
      %p39 = scmp.ne.s32.totalorder %s28, %s29
      %p40 = scmp.eq.s32.totalorder %s20, 0
      %p41 = por %p39, %p40
      %p42 = scmp.ne.s32.totalorder %s28, %s29
      %p43 = scmp.eq.s32.totalorder %s21, 1
      %p44 = por %p42, %p43
      %p46 = scmp.ne.s32.totalorder %s29, %s45
      %p47 = scmp.eq.s32.totalorder %s21, 0
      %p48 = por %p46, %p47
      %s50 = sadd.s32 %s49, 1
      %p53 = scmp.eq.s32.totalorder %s15, 1
      %p54 = scmp.ne.s32.totalorder %s49, %s51
      %p55 = scmp.eq.s32.totalorder %s15, 0
      %p56 = por %p54, %p55
      %p57 = scmp.ne.s32.totalorder %s49, %s51
      %p58 = scmp.eq.s32.totalorder %s20, 1
      %p59 = por %p57, %p58
      %p60 = scmp.ne.s32.totalorder %s51, %s52
      %p61 = scmp.eq.s32.totalorder %s20, 0
      %p62 = por %p60, %p61
      %p63 = scmp.ne.s32.totalorder %s51, %s52
      %p64 = scmp.eq.s32.totalorder %s21, 1
      %p65 = por %p63, %p64
      %p67 = scmp.ne.s32.totalorder %s52, %s66
      %p68 = scmp.eq.s32.totalorder %s21, 0
      %p69 = por %p67, %p68
      %s70 = ssub.s32 %s15, %s22
      %p71 = scmp.eq.s32.totalorder %s70, 0
      %s73 = sadd.s32 %s72, 1
      %s74 = scalar_select %p71, %s72, %s73
      %p77 = pneg %p71
      %p78 = scmp.eq.s32.totalorder %s15, 1
      %p79 = por %p77, %p78
      %p80 = scmp.ne.s32.totalorder %s72, %s75
      %p81 = scmp.eq.s32.totalorder %s15, 0
      %p82 = por %p80, %p81
      %p83 = scmp.ne.s32.totalorder %s72, %s75
      %p84 = scmp.eq.s32.totalorder %s20, 1
      %p85 = por %p83, %p84
      %p86 = scmp.ne.s32.totalorder %s75, %s76
      %p87 = scmp.eq.s32.totalorder %s20, 0
      %p88 = por %p86, %p87
      %p89 = scmp.ne.s32.totalorder %s75, %s76
      %p90 = scmp.eq.s32.totalorder %s21, 1
      %p91 = por %p89, %p90
      %p93 = scmp.ne.s32.totalorder %s76, %s92
      %p94 = scmp.eq.s32.totalorder %s21, 0
      %p95 = por %p93, %p94
      %p96 = scmp.le.s32.totalorder 1, %s15
      %p97 = scmp.lt.s32.totalorder %s15, 3
      %p98 = pnand %p96, %p97
      %p99 = pneg %p98
      // Predicated region
      $region9: #{tpu_custom_call.1} parent=5 // pred_check
        _
      $region10: #{tpu_custom_call.1} parent=5 // pred_check_branch
        %101 = sbr.rel (%p98) target = $region12
      $region11: #{tpu_custom_call.1} parent=5 // pred_region
        %s102 = ssub.s32 %s15, 1
        // Predicated region
        $region13: #{tpu_custom_call.1} parent=11 // pred_check
          %p103 = pneg %p62
        $region14: #{tpu_custom_call.1} parent=11 // pred_check_branch
          %105 = sbr.rel (%p103) target = $region16
        $region15: #{tpu_custom_call.1} parent=11 // pred_region
          %s107 = ssub.s32 64, 64
          %108 = vsyncadd [#allocation8], %s107
          %s110 = sshll.u32 [#allocation7], 4
          %s111 = int_to_ptr.vmem [resolvable:$true] %s110
          %113 = dma.hbm_to_vmem [thread:$0]  %s1, 64, %s111, [#allocation8]
        $region16: #{tpu_custom_call.1} parent=11 // pred_fallthru
          _
      $region12: #{tpu_custom_call.1} parent=5 // pred_fallthru
        _
      %p114 = scmp.lt.s32.totalorder %s15, 2
      // Predicated region
      $region17: #{tpu_custom_call.1} parent=5 // pred_check
        %p115 = pneg %p114
      $region18: #{tpu_custom_call.1} parent=5 // pred_check_branch
        %117 = sbr.rel (%p115) target = $region20
      $region19: #{tpu_custom_call.1} parent=5 // pred_region
        // Predicated region
        $region21: #{tpu_custom_call.1} parent=19 // pred_check
          %p118 = pneg %p35
        $region22: #{tpu_custom_call.1} parent=19 // pred_check_branch
          %120 = sbr.rel (%p118) target = $region24
        $region23: #{tpu_custom_call.1} parent=19 // pred_region
          %s121 = sand.u32 %s25, 1
          %s122 = scalar_lea.sflag [#allocation5], %s121
          %s123 = sand.u32 %s25, 1
          %s124 = smul.addr %s123, 8
          %s125 = scalar_lea.vmem [#allocation4], %s124
          %s127 = ssub.s32 128, 128
          %128 = vsyncadd %s122, %s127
          %s129 = smul.addr %s15, 2
          %s130 = smul.addr %s129, 64
          %s131 = scalar_lea.hbm %s0, %s130
          %s133 = sshll.u32 %s125, 4
          %s134 = int_to_ptr.vmem [resolvable:$true] %s133
          %136 = dma.hbm_to_vmem [thread:$0]  %s131, 128, %s134, %s122
        $region24: #{tpu_custom_call.1} parent=19 // pred_fallthru
          _
      $region20: #{tpu_custom_call.1} parent=5 // pred_fallthru
        _
      %p137 = scmp.le.s32.totalorder 1, %s15
      %p138 = scmp.lt.s32.totalorder %s15, 3
      %p139 = pnand %p137, %p138
      %p140 = pneg %p139
      // Predicated region
      $region25: #{tpu_custom_call.1} parent=5 // pred_check
        _
      $region26: #{tpu_custom_call.1} parent=5 // pred_check_branch
        %142 = sbr.rel (%p139) target = $region28
      $region27: #{tpu_custom_call.1} parent=5 // pred_region
        %s143 = ssub.s32 %s15, 1
        %s144 = sand.u32 %s28, 1
        %s145 = scalar_lea.sflag [#allocation5], %s144
        %s146 = sand.u32 %s28, 1
        %s147 = smul.addr %s146, 8
        %s148 = scalar_lea.vmem [#allocation4], %s147
        // Predicated region
        $region29: #{tpu_custom_call.1} parent=27 // pred_check
          %p149 = pneg %p41
        $region30: #{tpu_custom_call.1} parent=27 // pred_check_branch
          %151 = sbr.rel (%p149) target = $region32
        $region31: #{tpu_custom_call.1} parent=27 // pred_region
          %152 = dma.done %s145, 128
        $region32: #{tpu_custom_call.1} parent=27 // pred_fallthru
          _
        // Predicated region
        $region33: #{tpu_custom_call.1} parent=27 // pred_check
          %p153 = pneg %p62
        $region34: #{tpu_custom_call.1} parent=27 // pred_check_branch
          %155 = sbr.rel (%p153) target = $region36
        $region35: #{tpu_custom_call.1} parent=27 // pred_region
          %156 = dma.done [#allocation8], 64
        $region36: #{tpu_custom_call.1} parent=27 // pred_fallthru
          _
        %s157 = sand.u32 %s28, 1
        %s158 = scalar_lea.sflag [#allocation5], %s157
        %s159 = sand.u32 %s28, 1
        %s160 = smul.addr %s159, 8
        %s161 = scalar_lea.vmem [#allocation4], %s160
        %p162 = pneg %p41
        %p163 = pneg %p38
        %p164 = pneg %p62
        %p165 = pneg %p59
        %p166 = pneg %p88
        %p167 = pneg %p85
        %s168 = sand.u32 %s75, 1
        %s169 = scalar_lea.sflag [#allocation6], %s168
        %s170 = sand.u32 %s75, 1
        %s171 = smul.addr %s170, 8
        %s172 = scalar_lea.vmem [#allocation9], %s171
        %v173 = vld [vmem:[%s148] sm:$0xff]
        %174 = vst [vmem:[#allocation2] sm:$0xf] 0.0
        %175 = vst [vmem:[#allocation2 + $0xc] sm:$0xf] 0.0
        %176 = vst [vmem:[#allocation2 + $0x4] sm:$0xff] %v173
        %v177 = vlaneseq
        %v178 = vand.u32 %v177, 127
        %v179 = vadd.s32 %v178, 128
        %vm180 = vcmp.lt.s32.totalorder %v178, 0
        %v181 = vsub.s32 0, %v178
        %v182 = vsel %vm180, %v181, %v178
        %v183 = vshrl.u32 %v182, 4
        %v184 = vand.u32 %v182, 15
        %v185 = vsub.s32 0, %v184
        %v186 = vsel %vm180, %v185, %v184
        %vm187 = vcmp.lt.s32.totalorder %v179, 0
        %v188 = vsub.s32 0, %v179
        %v189 = vsel %vm187, %v188, %v179
        %v190 = vshrl.u32 %v189, 4
        %v191 = vand.u32 %v189, 15
        %v192 = vsub.s32 0, %v191
        %v193 = vsel %vm187, %v192, %v191
        %vm194 = vcmp.ne.s32.totalorder %v186, 0
        %vm195 = vcmp.ne.s32.totalorder %v193, 0
        %vm196 = vcmp.lt.s32.totalorder %v186, 0
        %vm197 = vcmp.lt.s32.totalorder %v193, 0
        %vm198 = vmand %vm196, %vm194
        %vm199 = vmand %vm197, %vm195
        %v200 = vadd.s32 %v186, 16
        %v201 = vadd.s32 %v193, 16
        %v202 = vsel %vm198, %v200, %v186
        %v203 = vsel %vm199, %v201, %v193
        %v204 = vld [vmem:[#allocation2] sm:$0xff]
        %v205 = vld [vmem:[#allocation2 + $0x8] sm:$0xf]
        %vm206 = vcmp.lt.s32.totalorder %v202, 1
        %vm207 = vcmp.lt.s32.totalorder %v203, 1
        %v210 = vcombine.high %v204, %v204
        %211 = vrot.lane.b32.xlu0 %v204, 17
        %v212 = vpop.permute.xlu0 %211
        %213 = vrot.lane.b32.xlu0 %v210, 17
        %v214 = vpop.permute.xlu0 %213
        %215 = vrot.lane.b32.xlu0 %v205, 17
        %v216 = vpop.permute.xlu0 %215
        %vm217 = vcmask 138240
        %v218 = vsel %vm217, %v212, %v214
        %v219 = vsel %vm217, %v214, %v216
        %v222 = vsel %vm206, 0.0, %v218
        %v223 = vsel %vm207, 0.0, %v219
        %224 = vst [vmem:[#allocation3] sm:$0xf] %v222
        %225 = vst [vmem:[#allocation3 + $0x8] sm:$0xf] %v223
        %v226 = vld [vmem:[#allocation2] sm:$0xff]
        %v227 = vld [vmem:[#allocation2 + $0x8] sm:$0xf]
        %v230 = vcombine.low %v226, %v226
        %v231 = vcombine.low %v227, %v227
        %232 = vrot.lane.b32.xlu0 %v230, 16
        %v233 = vpop.permute.xlu0 %232
        %234 = vrot.lane.b32.xlu0 %v226, 16
        %v235 = vpop.permute.xlu0 %234
        %236 = vrot.lane.b32.xlu0 %v231, 16
        %v237 = vpop.permute.xlu0 %236
        %vm238 = vcmask 130048
        %v239 = vsel %vm238, %v233, %v235
        %v240 = vsel %vm238, %v235, %v237
        %243 = vst [vmem:[#allocation3] sm:$0xf0] %v239
        %244 = vst [vmem:[#allocation3 + $0x8] sm:$0xf0] %v240
        %v245 = vld [vmem:[#allocation2] sm:$0xff]
        %v246 = vld [vmem:[#allocation2 + $0x8] sm:$0xf]
        %vm247 = vcmp.ge.s32.totalorder %v202, 15
        %vm248 = vcmp.ge.s32.totalorder %v203, 15
        %v251 = vcombine.high %v245, %v245
        %252 = vrot.lane.b32.xlu0 %v245, 15
        %v253 = vpop.permute.xlu0 %252
        %254 = vrot.lane.b32.xlu0 %v251, 15
        %v255 = vpop.permute.xlu0 %254
        %256 = vrot.lane.b32.xlu0 %v246, 15
        %v257 = vpop.permute.xlu0 %256
        %vm258 = vcmask 121856
        %v259 = vsel %vm258, %v253, %v255
        %v260 = vsel %vm258, %v255, %v257
        %v263 = vsel %vm247, 0.0, %v259
        %v264 = vsel %vm248, 0.0, %v260
        %265 = vst [vmem:[#allocation3 + $0x10] sm:$0xf] %v263
        %266 = vst [vmem:[#allocation3 + $0x18] sm:$0xf] %v264
        %v267 = vld [vmem:[#allocation2] sm:$0xff]
        %v268 = vld [vmem:[#allocation2 + $0x8] sm:$0xf]
        %v271 = vcombine.high %v267, %v267
        %272 = vrot.lane.b32.xlu0 %v267, 1
        %v273 = vpop.permute.xlu0 %272
        %274 = vrot.lane.b32.xlu0 %v271, 1
        %v275 = vpop.permute.xlu0 %274
        %276 = vrot.lane.b32.xlu0 %v268, 1
        %v277 = vpop.permute.xlu0 %276
        %vm278 = vcmask 7168
        %v279 = vsel %vm278, %v273, %v275
        %v280 = vsel %vm278, %v275, %v277
        %v283 = vsel %vm206, 0.0, %v279
        %v284 = vsel %vm207, 0.0, %v280
        %v287 = vrot.slane %v283, 4
        %v288 = vrot.slane %v284, 4
        %291 = vst [vmem:[#allocation3 + $0x10] sm:$0xf0] %v287
        %292 = vst [vmem:[#allocation3 + $0x18] sm:$0xf0] %v288
        %v293 = vld [vmem:[#allocation2 + $0x4] sm:$0xff]
        %v295 = vcombine.high %v293, %v293
        %297 = vst [vmem:[#allocation3 + $0x20] sm:$0xf] %v293
        %298 = vst [vmem:[#allocation3 + $0x28] sm:$0xf] %v295
        %v299 = vld [vmem:[#allocation2 + $0x4] sm:$0xff]
        %v300 = vld [vmem:[#allocation2 + $0xc] sm:$0xf]
        %v303 = vcombine.high %v299, %v299
        %304 = vrot.lane.b32.xlu0 %v299, 127
        %v305 = vpop.permute.xlu0 %304
        %306 = vrot.lane.b32.xlu0 %v303, 127
        %v307 = vpop.permute.xlu0 %306
        %308 = vrot.lane.b32.xlu0 %v300, 127
        %v309 = vpop.permute.xlu0 %308
        %vm310 = vcmask 1039360
        %v311 = vsel %vm310, %v305, %v307
        %v312 = vsel %vm310, %v307, %v309
        %v315 = vsel %vm247, 0.0, %v311
        %v316 = vsel %vm248, 0.0, %v312
        %v319 = vrot.slane %v315, 4
        %v320 = vrot.slane %v316, 4
        %323 = vst [vmem:[#allocation3 + $0x20] sm:$0xf0] %v319
        %324 = vst [vmem:[#allocation3 + $0x28] sm:$0xf0] %v320
        %v325 = vld [vmem:[#allocation2 + $0x4] sm:$0xff]
        %v326 = vld [vmem:[#allocation2 + $0xc] sm:$0xf]
        %v329 = vcombine.high %v325, %v325
        %330 = vrot.lane.b32.xlu0 %v325, 113
        %v331 = vpop.permute.xlu0 %330
        %332 = vrot.lane.b32.xlu0 %v329, 113
        %v333 = vpop.permute.xlu0 %332
        %334 = vrot.lane.b32.xlu0 %v326, 113
        %v335 = vpop.permute.xlu0 %334
        %vm336 = vcmask 924672
        %v337 = vsel %vm336, %v331, %v333
        %v338 = vsel %vm336, %v333, %v335
        %v341 = vsel %vm206, 0.0, %v337
        %v342 = vsel %vm207, 0.0, %v338
        %343 = vst [vmem:[#allocation3 + $0x30] sm:$0xf] %v341
        %344 = vst [vmem:[#allocation3 + $0x38] sm:$0xf] %v342
        %v345 = vld [vmem:[#allocation2 + $0x4] sm:$0xff]
        %v346 = vld [vmem:[#allocation2 + $0xc] sm:$0xf]
        %v349 = vcombine.low %v345, %v345
        %v350 = vcombine.low %v346, %v346
        %351 = vrot.lane.b32.xlu0 %v349, 112
        %v352 = vpop.permute.xlu0 %351
        %353 = vrot.lane.b32.xlu0 %v345, 112
        %v354 = vpop.permute.xlu0 %353
        %355 = vrot.lane.b32.xlu0 %v350, 112
        %v356 = vpop.permute.xlu0 %355
        %vm357 = vcmask 916480
        %v358 = vsel %vm357, %v352, %v354
        %v359 = vsel %vm357, %v354, %v356
        %362 = vst [vmem:[#allocation3 + $0x30] sm:$0xf0] %v358
        %363 = vst [vmem:[#allocation3 + $0x38] sm:$0xf0] %v359
        %v364 = vld [vmem:[#allocation2 + $0x4] sm:$0xff]
        %v365 = vld [vmem:[#allocation2 + $0xc] sm:$0xf]
        %v368 = vcombine.high %v364, %v364
        %369 = vrot.lane.b32.xlu0 %v364, 111
        %v370 = vpop.permute.xlu0 %369
        %371 = vrot.lane.b32.xlu0 %v368, 111
        %v372 = vpop.permute.xlu0 %371
        %373 = vrot.lane.b32.xlu0 %v365, 111
        %v374 = vpop.permute.xlu0 %373
        %vm375 = vcmask 908288
        %v376 = vsel %vm375, %v370, %v372
        %v377 = vsel %vm375, %v372, %v374
        %v380 = vsel %vm247, 0.0, %v376
        %v381 = vsel %vm248, 0.0, %v377
        %382 = vst [vmem:[#allocation3 + $0x40] sm:$0xf] %v380
        %383 = vst [vmem:[#allocation3 + $0x48] sm:$0xf] %v381
        %v384 = vlaneseq
        %vm385 = vcmp.ge.s32.totalorder %v384, 0
        %vm386 = vcmp.lt.s32.totalorder %v384, 256
        %vm387 = vmand %vm385, %vm386
        %s388 = scalar_lea.vmem [#allocation3], 68
        %389 = vst.msk [vmem:[%s388] ss:$8 sm:$0x3] %vm387, 1.0
        %390 = vst.msk [vmem:[%s388] ss:$8 sm:$0x0] %vm387, 1.0
        %v391 = vld [vmem:[#allocation7] sm:$0xf]
        %v392 = vld [vmem:[#allocation3] sm:$0xff]
        %v393 = vld [vmem:[#allocation3 + $0x8] sm:$0xff]
        %v394 = vld [vmem:[#allocation3 + $0x10] sm:$0xff]
        %v395 = vld [vmem:[#allocation3 + $0x18] sm:$0xff]
        %v396 = vld [vmem:[#allocation3 + $0x20] sm:$0xff]
        %v397 = vld [vmem:[#allocation3 + $0x28] sm:$0xff]
        %v398 = vld [vmem:[#allocation3 + $0x30] sm:$0xff]
        %v399 = vld [vmem:[#allocation3 + $0x38] sm:$0xff]
        %v400 = vld [vmem:[#allocation3 + $0x40] sm:$0x1f]
        %v401 = vld [vmem:[#allocation3 + $0x48] sm:$0x1f]
        %vm402 = vcmask 302080
        %v404 = vsel %vm402, %v391, 0
        %vm406 = vcmask 1044480
        %v408 = vsel %vm406, %v400, 0
        %v411 = vsel %vm406, %v401, 0
        %413 = vmatprep.subr.mxu0 %v393
        %414 = vmatpush1.msra.mxu0 %v392
        %415 = vmatprep.subr.mxu0 %v395
        %416 = vmatpush1.msra.mxu0 %v394
        %417 = vmatprep.subr.mxu0 %v397
        %418 = vmatpush1.msra.mxu0 %v396
        %419 = vmatprep.subr.mxu0 %v399
        %420 = vmatpush1.msra.mxu0 %v398
        %421 = vmatprep.subr.mxu0 %v411
        %422 = vmatpush1.msra.mxu0 %v408
        %423 = vmatprep.subr.mxu0 0.0
        %424 = vmatpush1.msra.mxu0 0.0
        %425 = vmatprep.subr.mxu0 0.0
        %426 = vmatpush1.msra.mxu0 0.0
        %427 = vmatprep.subr.mxu0 0.0
        %428 = vmatpush1.msra.mxu0 0.0
        %429 = vmatprep.subr.mxu0 0.0
        %430 = vmatpush1.msra.mxu0 0.0
        %431 = vmatprep.subr.mxu0 0.0
        %432 = vmatpush1.msra.mxu0 0.0
        %433 = vmatprep.subr.mxu0 0.0
        %434 = vmatpush1.msra.mxu0 0.0
        %435 = vmatprep.subr.mxu0 0.0
        %436 = vmatpush1.msra.mxu0 0.0
        %437 = vmatprep.subr.mxu0 0.0
        %438 = vmatpush1.msra.mxu0 0.0
        %439 = vmatprep.subr.mxu0 0.0
        %440 = vmatpush1.msra.mxu0 0.0
        %441 = vmatprep.subr.mxu0 0.0
        %442 = vmatpush1.msra.mxu0 0.0
        %443 = vmatprep.subr.mxu0 0.0
        %444 = vmatpush1.msra.mxu0 0.0
        %445 = vmatprep.subr.mxu0 0.0
        %446 = vmatpush1.msra.mxu0 0.0
        %447 = vmatprep.subr.mxu0 0.0
        %448 = vmatpush1.msra.mxu0 0.0
        %449 = vmatprep.subr.mxu0 0.0
        %450 = vmatpush1.msra.mxu0 0.0
        %451 = vmatprep.subr.mxu0 0.0
        %452 = vmatpush1.msra.mxu0 0.0
        %453 = vmatprep.subr.mxu0 0.0
        %454 = vmatpush1.msra.mxu0 0.0
        %455 = vmatprep.subr.mxu0 0.0
        %456 = vmatpush1.msra.mxu0 0.0
        %457 = vmatprep.subr.mxu0 0.0
        %458 = vmatpush1.msra.mxu0 0.0
        %459 = vmatprep.subr.mxu0 0.0
        %460 = vmatpush1.msra.mxu0 0.0
        %461 = vmatprep.subr.mxu0 0.0
        %462 = vmatpush1.msra.mxu0 0.0
        %463 = vmatprep.subr.mxu0 0.0
        %464 = vmatpush1.msra.mxu0 0.0
        %465 = vmatprep.subr.mxu0 0.0
        %466 = vmatpush1.msra.mxu0 0.0
        %467 = vmatprep.subr.mxu0 0.0
        %468 = vmatpush1.msra.mxu0 0.0
        %469 = vmatprep.subr.mxu0 0.0
        %470 = vmatpush1.msra.mxu0 0.0
        %471 = vmatprep.subr.mxu0 0.0
        %472 = vmatpush1.msra.mxu0 0.0
        %473 = vmatprep.subr.mxu0 0.0
        %474 = vmatpush1.msra.mxu0 0.0
        %475 = vmatprep.subr.mxu0 0.0
        %476 = vmatpush1.msra.mxu0 0.0
        %477 = vmatprep.mubr.f32.mxu0 0.0
        %478 = vmatmul.mubr.f32.gmra.mrb[0].mxu0 %v404
        %v479 = vpop.f32.mrb[0].mxu0
        %v480 = vadd.f32 0.0, %v479
        %v481 = vpop.f32.mrb[0].mxu0
        %v482 = vadd.f32 0.0, %v481
        %483 = vdwg.mxu0
        %v486 = vcombine.low %v480, %v482
        %488 = vst [vmem:[%s172] sm:$0xff] %v486
        %s489 = sand.u32 %s75, 1
        %s490 = scalar_lea.sflag [#allocation6], %s489
        %s491 = sand.u32 %s75, 1
        %s492 = smul.addr %s491, 8
        %s493 = scalar_lea.vmem [#allocation9], %s492
        // Predicated region
        $region37: #{tpu_custom_call.1} parent=27 // pred_check
          %p494 = pneg %p85
        $region38: #{tpu_custom_call.1} parent=27 // pred_check_branch
          %496 = sbr.rel (%p494) target = $region40
        $region39: #{tpu_custom_call.1} parent=27 // pred_region
          %s498 = ssub.s32 128, 128
          %499 = vsyncadd %s490, %s498
          %s500 = smul.addr %s20, 2
          %s501 = smul.addr %s500, 64
          %s502 = scalar_lea.hbm %s2, %s501
          %s504 = sshll.u32 %s493, 4
          %s505 = int_to_ptr.vmem [resolvable:$true] %s504
          %507 = dma.vmem_to_hbm [thread:$0]  %s505, 128, %s502, %s490
        $region40: #{tpu_custom_call.1} parent=27 // pred_fallthru
          _
      $region28: #{tpu_custom_call.1} parent=5 // pred_fallthru
        _
      %p508 = scmp.le.s32.totalorder 2, %s15
      // Predicated region
      $region41: #{tpu_custom_call.1} parent=5 // pred_check
        %p509 = pneg %p508
      $region42: #{tpu_custom_call.1} parent=5 // pred_check_branch
        %511 = sbr.rel (%p509) target = $region44
      $region43: #{tpu_custom_call.1} parent=5 // pred_region
        %s512 = ssub.s32 %s15, 2
        // Predicated region
        $region45: #{tpu_custom_call.1} parent=43 // pred_check
          %p513 = pneg %p91
        $region46: #{tpu_custom_call.1} parent=43 // pred_check_branch
          %515 = sbr.rel (%p513) target = $region48
        $region47: #{tpu_custom_call.1} parent=43 // pred_region
          %s516 = sand.u32 %s76, 1
          %s517 = scalar_lea.sflag [#allocation6], %s516
          %s518 = sand.u32 %s76, 1
          %s519 = smul.addr %s518, 8
          %s520 = scalar_lea.vmem [#allocation9], %s519
          %521 = dma.done %s517, 128
        $region48: #{tpu_custom_call.1} parent=43 // pred_fallthru
          _
      $region44: #{tpu_custom_call.1} parent=5 // pred_fallthru
        _
    $region6: #{tpu_custom_call.1} parent=1 // loop_footer
      %s19 = sadd.s32 1, %s15
    $region7: #{tpu_custom_call.1} parent=1 // loop_footer_branch
      %14 = sbr.rel target = $region3
    $region8: #{tpu_custom_call.1} parent=1 // loop_exit
      _
    %522 = vsyncpa [#allocation5], 1
    %s523 = scalar_lea.sflag [#allocation5], 1
    %524 = vsyncpa %s523, 1
    %525 = vsyncpa [#allocation8], 1
    %526 = vsyncpa [#allocation6], 1
    %s527 = scalar_lea.sflag [#allocation6], 1
    %528 = vsyncpa %s527, 1

</llo_original>
